<compile_context>
chip_gen: v6e
topology: v6e:2x2x1
jax: 0.10.0
libtpu: 0.0.40
codegen_flags: <defaults>
</compile_context>

<pallas_src>
import functools

import jax
import jax.numpy as jnp
from jax import lax
from jax.experimental import pallas as pl
from jax.experimental.pallas import tpu as pltpu


# ---------------------------------------------------------------------------
# helpers
# ---------------------------------------------------------------------------

def _round_up(x, m):
    return ((x + m - 1) // m) * m


def _pick_block_b(batch, bytes_per_row, *, desired=256, vmem_budget=20 << 20):
    """Large batch block (amortize the ~0.35us/step overhead), multiple of 8,
    >=2 grid steps when batch allows it, bounded by a conservative VMEM budget
    (safe under v7x's 32 MiB scoped default)."""
    bb = desired
    if batch > 8:
        bb = min(bb, _round_up(-(-batch // 2), 8))       # keep >= 2 grid steps
    max_rows = max(8, (vmem_budget // max(bytes_per_row, 1)) // 8 * 8)
    bb = min(bb, max_rows)
    return max(8, _round_up(min(bb, _round_up(batch, 8)), 8))


# ---------------------------------------------------------------------------
# dense-slab path (small S): auto-pipelined slab + in-VMEM one-hot select
# ---------------------------------------------------------------------------

def _dense_kernel(cur_ref, idx_ref, enc_ref, out_ref):
    """One grid step == one block of batch rows, everything in VMEM.

    cur_ref : (BB, D)        current_node rows
    idx_ref : (BB, P) int32  per-provider gather indices (-1 == no context)
    enc_ref : (BB, S, D)     encoded_input slab (auto double-buffered from HBM)
    out_ref : (BB, D)
    """
    bb, s, _ = enc_ref.shape
    num_providers = idx_ref.shape[1]

    idx = idx_ref[...]                                         # (BB, P)
    pos = lax.broadcasted_iota(jnp.int32, (bb, s), 1)          # (BB, S)

    # Sum of masked one-hot selectors -> per-position weights (counts).
    w = jnp.zeros((bb, s), jnp.float32)
    for p in range(num_providers):                             # P small & static
        ip = idx[:, p:p + 1]                                   # (BB, 1)
        w = w + jnp.where((pos == ip) & (ip >= 0), 1.0, 0.0)

    # TODO(synk): with non-finite garbage at unselected positions this differs
    # from the reference's where-masking; real encoder outputs are finite.
    gathered = jnp.sum(w[:, :, None] * enc_ref[...].astype(jnp.float32), axis=1)
    out_ref[...] = (cur_ref[...].astype(jnp.float32) + gathered).astype(out_ref.dtype)


# ---------------------------------------------------------------------------
# gather path (large S): HBM row gathers, double-buffered across grid steps
# ---------------------------------------------------------------------------

def _gather_kernel(num_providers, block_b, batch_real,
                   idx_smem, cur_ref, idxv_ref, enc_hbm, out_ref,
                   gather_buf, sems):
    """One grid step == one block of `block_b` batch rows.

    idx_smem   : SMEM (P, B_pad) int32  -- scalar-prefetched gather indices
    cur_ref    : VMEM (BB, D)           -- current_node rows of this block
    idxv_ref   : VMEM (BB, P) int32     -- same indices, vector layout (mask)
    enc_hbm    : ANY  (B, S, D)         -- encoded_input, left in HBM
    out_ref    : VMEM (BB, D)
    gather_buf : VMEM (2*P, BB, D)      -- double-buffered gathered rows
    sems       : DMA sems, shape (2*P,) -- one per (slot, provider)
    """
    step = pl.program_id(0)
    num_steps = pl.num_programs(0)
    slot = step % 2

    def issue(target_step, target_slot):
        base = target_step * block_b
        for p in range(num_providers):                         # P small & static
            buf_idx = target_slot * num_providers + p

            def body(r, carry):
                gb = base + r
                row = jnp.maximum(idx_smem[p, gb], 0)          # clamp -1 (masked later)
                src_b = jnp.minimum(gb, batch_real - 1)        # guard batch padding
                pltpu.make_async_copy(
                    enc_hbm.at[src_b, pl.ds(row, 1), :],       # (1, D) HBM row
                    gather_buf.at[buf_idx, pl.ds(r, 1), :],    # (1, D) VMEM slot
                    sems.at[buf_idx],
                ).start()
                return carry

            lax.fori_loop(0, block_b, body, 0)

    @pl.when(step == 0)
    def _():
        issue(0, 0)                              # prime the pipeline

    @pl.when(step + 1 < num_steps)
    def _():
        issue(step + 1, 1 - slot)                # prefetch next block's rows

    acc = cur_ref[...].astype(jnp.float32)
    valid = idxv_ref[...] >= 0                   # (BB, P)
    for p in range(num_providers):
        buf_idx = slot * num_providers + p
        # One aggregate wait per provider: the BB single-row copies all signal
        # sems[buf_idx]; this descriptor's byte count equals their sum.
        pltpu.make_async_copy(gather_buf.at[buf_idx], gather_buf.at[buf_idx],
                              sems.at[buf_idx]).wait()
        gathered = gather_buf[buf_idx].astype(jnp.float32)     # (BB, D)
        acc = acc + jnp.where(valid[:, p:p + 1], gathered, 0.0)

    out_ref[...] = acc.astype(out_ref.dtype)


# ---------------------------------------------------------------------------
# wrapper
# ---------------------------------------------------------------------------

def sum_context_provider(current_node, encoded_input, provider_indices, *,
                         block_b=None, path="auto"):
    """current_node: (B, D); encoded_input: (B, S, D); provider_indices: (P, B) int32."""
    B, D = current_node.shape
    Be, S, De = encoded_input.shape
    P, Bi = provider_indices.shape
    assert Be == B and De == D and Bi == B

    enc_item = jnp.dtype(encoded_input.dtype).itemsize
    cur_item = jnp.dtype(current_node.dtype).itemsize

    if path == "auto":
        # Small sequences: streaming the dense (BB, S, D) slab beats many tiny
        # (D*bytes) row gathers; contiguous BlockSpec DMAs run near roofline.
        path = "dense" if S <= max(8, 8 * P) else "gather"

    if path == "dense":
        bytes_per_row = 2 * S * D * enc_item + 4 * D * cur_item
    else:
        bytes_per_row = 2 * P * D * enc_item + 4 * D * cur_item

    if block_b is None:
        block_b = _pick_block_b(B, bytes_per_row)
    assert block_b % 8 == 0, "batch block must be a multiple of 8 (sublanes)"

    b_pad = _round_up(B, block_b)
    pad = b_pad - B
    cur_p = jnp.pad(current_node, ((0, pad), (0, 0))) if pad else current_node
    idx_p = (jnp.pad(provider_indices, ((0, 0), (0, pad)), constant_values=-1)
             if pad else provider_indices).astype(jnp.int32)
    idx_t = idx_p.T                                            # (B_pad, P)

    grid = (b_pad // block_b,)

    if path == "dense":
        enc_p = (jnp.pad(encoded_input, ((0, pad), (0, 0), (0, 0)))
                 if pad else encoded_input)
        out = pl.pallas_call(
            _dense_kernel,
            out_shape=jax.ShapeDtypeStruct((b_pad, D), current_node.dtype),
            grid=grid,
            in_specs=[
                pl.BlockSpec((block_b, D), lambda b: (b, 0)),          # current rows
                pl.BlockSpec((block_b, P), lambda b: (b, 0)),          # indices (vec)
                pl.BlockSpec((block_b, S, D), lambda b: (b, 0, 0)),    # enc slab
            ],
            out_specs=pl.BlockSpec((block_b, D), lambda b: (b, 0)),
            compiler_params=pltpu.CompilerParams(
                dimension_semantics=("parallel",)),                    # independent steps
        )(cur_p, idx_t, enc_p)
        return out[:B]

    # ----- gather path -----
    kernel = functools.partial(_gather_kernel, P, block_b, B)
    grid_spec = pltpu.PrefetchScalarGridSpec(
        num_scalar_prefetch=1,                       # (P, B_pad) indices -> SMEM
        grid=grid,
        in_specs=[
            pl.BlockSpec((block_b, D), lambda b, idx: (b, 0)),         # current rows
            pl.BlockSpec((block_b, P), lambda b, idx: (b, 0)),         # indices (vec)
            pl.BlockSpec(memory_space=pl.ANY),                         # enc in HBM
        ],
        out_specs=pl.BlockSpec((block_b, D), lambda b, idx: (b, 0)),
        scratch_shapes=[
            pltpu.VMEM((2 * P, block_b, D), encoded_input.dtype),      # double buffer
            pltpu.SemaphoreType.DMA((2 * P,)),
        ],
    )
    out = pl.pallas_call(
        kernel,
        out_shape=jax.ShapeDtypeStruct((b_pad, D), current_node.dtype),
        grid_spec=grid_spec,
        compiler_params=pltpu.CompilerParams(
            dimension_semantics=("arbitrary",),      # cross-step carried prefetch
        ),
    )(idx_p, cur_p, idx_t, encoded_input)
    return out[:B]


# ---------------------------------------------------------------------------
# pure-JAX reference of the PyTorch forward semantics
# ---------------------------------------------------------------------------

def _reference(current_node, encoded_input, provider_indices):
    r = current_node.astype(jnp.float32)
    B = current_node.shape[0]
    for p in range(provider_indices.shape[0]):
        idx = provider_indices[p]                              # (B,)
        safe = jnp.maximum(idx, 0)
        gathered = encoded_input[jnp.arange(B), safe].astype(jnp.float32)
        gathered = jnp.where((idx >= 0)[:, None], gathered, 0.0)
        r = r + gathered
    return r.astype(current_node.dtype)


if __name__ == "__main__":
    key = jax.random.PRNGKey(0)
    k1, k2, k3, k4, k5, k6 = jax.random.split(key, 6)

    # --- small spec-consistent shapes (short seq -> dense-slab path) ---
    B, S, D, P = 2, 8, 32, 3
    current_node = jax.random.normal(k1, (B, D), dtype=jnp.float32)
    encoded_input = jax.random.normal(k2, (B, S, D), dtype=jnp.float32)
    provider_indices = jax.random.randint(k3, (P, B), minval=-1, maxval=S,
                                          dtype=jnp.int32)

    out = sum_context_provider(current_node, encoded_input, provider_indices)
    jax.block_until_ready(out)
    ref = _reference(current_node, encoded_input, provider_indices)
    assert out.shape == (B, D)
    assert jnp.allclose(out, ref, atol=1e-5, rtol=1e-5), "dense path mismatch"

    # --- longer sequence -> double-buffered HBM row-gather path ---
    B2, S2, D2, P2 = 20, 64, 128, 2
    cur2 = jax.random.normal(k4, (B2, D2), dtype=jnp.float32)
    enc2 = jax.random.normal(k5, (B2, S2, D2), dtype=jnp.float32)
    idx2 = jax.random.randint(k6, (P2, B2), minval=-1, maxval=S2, dtype=jnp.int32)

    out2 = sum_context_provider(cur2, enc2, idx2, path="gather")
    jax.block_until_ready(out2)
    ref2 = _reference(cur2, enc2, idx2)
    assert out2.shape == (B2, D2)
    assert jnp.allclose(out2, ref2, atol=1e-5, rtol=1e-5), "gather path mismatch"

    print("KERNEL_OK")
</pallas_src>

<mosaic_0001>
module attributes {stable_mosaic.version = 11 : i64} {
  func.func @_dense_kernel(%arg0: i32, %arg1: memref<8x32xf32, #tpu.memory_space<vmem>>, %arg2: memref<8x3xi32, #tpu.memory_space<vmem>>, %arg3: memref<8x8x32xf32, #tpu.memory_space<vmem>>, %arg4: memref<8x32xf32, #tpu.memory_space<vmem>>) attributes {dimension_semantics = [#tpu.dimension_semantics<parallel>], iteration_bounds = array<i64: 1>, scalar_prefetch = 0 : i64, scratch_operands = 0 : i64, tpu.core_type = #tpu.core_type<tc>, window_params = [{transform_indices = @transform_0, window_bounds = array<i64: 8, 32>}, {transform_indices = @transform_1, window_bounds = array<i64: 8, 3>}, {transform_indices = @transform_2, window_bounds = array<i64: 8, 8, 32>}, {transform_indices = @transform_3, window_bounds = array<i64: 8, 32>}]} {
    %c0 = arith.constant 0 : index
    %c0_0 = arith.constant 0 : index
    %0 = vector.load %arg2[%c0, %c0_0] : memref<8x3xi32, #tpu.memory_space<vmem>>, vector<8x3xi32>
    %1 = tpu.iota {dimensions = array<i32: 1>} : vector<8x8xi32>
    %cst = arith.constant 0.000000e+00 : f32
    %2 = vector.broadcast %cst : f32 to vector<8x8xf32>
    %3 = vector.extract_strided_slice %0 {offsets = [0, 0], sizes = [8, 1], strides = [1, 1]} : vector<8x3xi32> to vector<8x1xi32>
    %4 = vector.broadcast %3 : vector<8x1xi32> to vector<8x8xi32>
    %5 = arith.cmpi eq, %1, %4 : vector<8x8xi32>
    %c0_i32 = arith.constant 0 : i32
    %6 = vector.broadcast %c0_i32 : i32 to vector<8x1xi32>
    %7 = arith.cmpi sge, %3, %6 : vector<8x1xi32>
    %8 = vector.broadcast %7 : vector<8x1xi1> to vector<8x8xi1>
    %9 = arith.andi %5, %8 : vector<8x8xi1>
    %cst_1 = arith.constant 1.000000e+00 : f32
    %cst_2 = arith.constant 0.000000e+00 : f32
    %10 = vector.broadcast %cst_1 : f32 to vector<8x8xf32>
    %11 = vector.broadcast %cst_2 : f32 to vector<8x8xf32>
    %12 = arith.select %9, %10, %11 : vector<8x8xi1>, vector<8x8xf32>
    %13 = arith.addf %2, %12 : vector<8x8xf32>
    %14 = vector.extract_strided_slice %0 {offsets = [0, 1], sizes = [8, 1], strides = [1, 1]} : vector<8x3xi32> to vector<8x1xi32>
    %15 = vector.broadcast %14 : vector<8x1xi32> to vector<8x8xi32>
    %16 = arith.cmpi eq, %1, %15 : vector<8x8xi32>
    %c0_i32_3 = arith.constant 0 : i32
    %17 = vector.broadcast %c0_i32_3 : i32 to vector<8x1xi32>
    %18 = arith.cmpi sge, %14, %17 : vector<8x1xi32>
    %19 = vector.broadcast %18 : vector<8x1xi1> to vector<8x8xi1>
    %20 = arith.andi %16, %19 : vector<8x8xi1>
    %cst_4 = arith.constant 1.000000e+00 : f32
    %cst_5 = arith.constant 0.000000e+00 : f32
    %21 = vector.broadcast %cst_4 : f32 to vector<8x8xf32>
    %22 = vector.broadcast %cst_5 : f32 to vector<8x8xf32>
    %23 = arith.select %20, %21, %22 : vector<8x8xi1>, vector<8x8xf32>
    %24 = arith.addf %13, %23 : vector<8x8xf32>
    %25 = vector.extract_strided_slice %0 {offsets = [0, 2], sizes = [8, 1], strides = [1, 1]} : vector<8x3xi32> to vector<8x1xi32>
    %26 = vector.broadcast %25 : vector<8x1xi32> to vector<8x8xi32>
    %27 = arith.cmpi eq, %1, %26 : vector<8x8xi32>
    %c0_i32_6 = arith.constant 0 : i32
    %28 = vector.broadcast %c0_i32_6 : i32 to vector<8x1xi32>
    %29 = arith.cmpi sge, %25, %28 : vector<8x1xi32>
    %30 = vector.broadcast %29 : vector<8x1xi1> to vector<8x8xi1>
    %31 = arith.andi %27, %30 : vector<8x8xi1>
    %cst_7 = arith.constant 1.000000e+00 : f32
    %cst_8 = arith.constant 0.000000e+00 : f32
    %32 = vector.broadcast %cst_7 : f32 to vector<8x8xf32>
    %33 = vector.broadcast %cst_8 : f32 to vector<8x8xf32>
    %34 = arith.select %31, %32, %33 : vector<8x8xi1>, vector<8x8xf32>
    %35 = arith.addf %24, %34 : vector<8x8xf32>
    %36 = vector.shape_cast %35 : vector<8x8xf32> to vector<8x8x1xf32>
    %c0_9 = arith.constant 0 : index
    %c0_10 = arith.constant 0 : index
    %c0_11 = arith.constant 0 : index
    %37 = vector.load %arg3[%c0_9, %c0_10, %c0_11] : memref<8x8x32xf32, #tpu.memory_space<vmem>>, vector<8x8x32xf32>
    %38 = vector.broadcast %36 : vector<8x8x1xf32> to vector<8x8x32xf32>
    %39 = arith.mulf %38, %37 : vector<8x8x32xf32>
    %cst_12 = arith.constant dense<0.000000e+00> : vector<8x32xf32>
    %40 = vector.multi_reduction <add>, %39, %cst_12 [1] : vector<8x8x32xf32> to vector<8x32xf32>
    %c0_13 = arith.constant 0 : index
    %c0_14 = arith.constant 0 : index
    %41 = vector.load %arg1[%c0_13, %c0_14] : memref<8x32xf32, #tpu.memory_space<vmem>>, vector<8x32xf32>
    %42 = arith.addf %41, %40 : vector<8x32xf32>
    %c0_15 = arith.constant 0 : index
    %c0_16 = arith.constant 0 : index
    %43 = vector.load %arg4[%c0_15, %c0_16] : memref<8x32xf32, #tpu.memory_space<vmem>>, vector<8x32xf32>
    tpu.vector_store %arg4[%c0_15, %c0_16], %42 {strides = array<i32>} : memref<8x32xf32, #tpu.memory_space<vmem>>, vector<8x32xf32>,
    return
  }
  func.func @transform_0(%arg0: i32) -> (i32, i32) {
    %c0_i32 = arith.constant 0 : i32
    %c0_i32_0 = arith.constant 0 : i32
    return %arg0, %c0_i32 : i32, i32
  }
  func.func @transform_1(%arg0: i32) -> (i32, i32) {
    %c0_i32 = arith.constant 0 : i32
    %c0_i32_0 = arith.constant 0 : i32
    return %arg0, %c0_i32 : i32, i32
  }
  func.func @transform_2(%arg0: i32) -> (i32, i32, i32) {
    %c0_i32 = arith.constant 0 : i32
    %c0_i32_0 = arith.constant 0 : i32
    %c0_i32_1 = arith.constant 0 : i32
    return %arg0, %c0_i32, %c0_i32_0 : i32, i32, i32
  }
  func.func @transform_3(%arg0: i32) -> (i32, i32) {
    %c0_i32 = arith.constant 0 : i32
    %c0_i32_0 = arith.constant 0 : i32
    return %arg0, %c0_i32 : i32, i32
  }
}

</mosaic_0001>

<llo_original>
// kernel: tpu_custom_call.1
$region0: #{tpu_custom_call.1}
  #allocation0 [shape = 'u32[]', space=smem, size = 0x4, offset = 0x4, fixed_abs, tag = 'smem constant byte address 0x4 - core index']
  #allocation1 [shape = 'u32[144,128]{1,0:T(1,128)}', space=vmem, size = 0x12000, scoped, tag = 'internal scratch']
  %s0 = inlined_call_operand.vmem [shape: f32[8,32], index: 0, kind: input, shape index: {}]
  %s1 = inlined_call_operand.vmem [shape: s32[8,3], index: 1, kind: input, shape index: {}]
  %s2 = inlined_call_operand.hbm [shape: f32[8,8,32], index: 2, kind: input, shape index: {}]
  %s3 = inlined_call_operand.hbm [shape: f32[8,32], index: 3, kind: output, shape index: {}]
  %s4 = sld [smem:[#allocation0]]
  $region26: #{tpu_custom_call.1} parent=0
    _
  %s6 = ssub.s32 1, %s4
  %s7 = scalar_select 0, %s6, %s4
  $region1: #{tpu_custom_call.1} parent=0
    #allocation2 [shape = 'u8[32768]{0}', space=vmem, size = 0x8000, scoped, tag = 'input window, operand 2, single buffered']
    #allocation3 [shape = 's32[1]{0}', space=sflag, size = 0x4, scoped, tag = 'scoped memory for tpu_custom_call.1']
    #allocation4 [shape = 's32[1]{0}', space=sflag, size = 0x4, scoped, tag = 'scoped memory for tpu_custom_call.1']
    #allocation5 [shape = 'u8[4096]{0}', space=vmem, size = 0x1000, scoped, tag = 'output window, operand 0, single buffered']
    %8 = vsyncpa [#allocation3], 0
    %9 = vsyncpa [#allocation4], 0
    // Predicated region
    $region2: #{tpu_custom_call.1} parent=1 // pred_check
      _
    $region3: #{tpu_custom_call.1} parent=1 // pred_check_branch
      %11 = sbr.rel (0) target = $region5
    $region4: #{tpu_custom_call.1} parent=1 // pred_region
      _
    $region5: #{tpu_custom_call.1} parent=1 // pred_fallthru
      _
    // Predicated region
    $region6: #{tpu_custom_call.1} parent=1 // pred_check
      _
    $region7: #{tpu_custom_call.1} parent=1 // pred_check_branch
      %13 = sbr.rel (0) target = $region9
    $region8: #{tpu_custom_call.1} parent=1 // pred_region
      _
    $region9: #{tpu_custom_call.1} parent=1 // pred_fallthru
      _
    // Predicated region
    $region10: #{tpu_custom_call.1} parent=1 // pred_check
      _
    $region11: #{tpu_custom_call.1} parent=1 // pred_check_branch
      %15 = sbr.rel (0) target = $region13
    $region12: #{tpu_custom_call.1} parent=1 // pred_region
      %s17 = ssub.s32 1024, 1024
      %18 = vsyncadd [#allocation3], %s17
      %s19 = sshll.u32 [#allocation2], 4
      %s20 = int_to_ptr.vmem [resolvable:$true] %s19
      %25 = dma.hbm_to_vmem [thread:$0]  %s2, 1024, %s20, [#allocation3], 128, 128, 8
    $region13: #{tpu_custom_call.1} parent=1 // pred_fallthru
      _
    // Predicated region
    $region14: #{tpu_custom_call.1} parent=1 // pred_check
      _
    $region15: #{tpu_custom_call.1} parent=1 // pred_check_branch
      %27 = sbr.rel (0) target = $region17
    $region16: #{tpu_custom_call.1} parent=1 // pred_region
      %28 = dma.done [#allocation3], 1024
    $region17: #{tpu_custom_call.1} parent=1 // pred_fallthru
      _
    %v29 = vld [vmem:[%s1] sm:$0xff]
    %v30 = vlaneseq
    %v31 = vand.u32 %v30, 127
    %32 = vset.pattern.permute.xlu0 0
    %33 = vperm.xlu0 %32, %v29
    %v34 = vpop.permute.xlu0 %33
    %vm35 = vcmp.eq.s32.totalorder %v31, %v34
    %vm36 = vcmp.ge.s32.totalorder %v29, 0
    %v37 = vsel %vm36, 1, 0
    %38 = vset.pattern.permute.xlu0 0
    %39 = vperm.xlu0 %38, %v37
    %v40 = vpop.permute.xlu0 %39
    %vm41 = vcmp.eq.s32.totalorder %v40, 1
    %vm42 = vmand %vm35, %vm41
    %v43 = vsel %vm42, 1.0, 0.0
    %v44 = vadd.f32 %v43, 0.0
    %45 = vset.pattern.permute.xlu0 1
    %46 = vperm.xlu0 %45, %v29
    %v47 = vpop.permute.xlu0 %46
    %vm48 = vcmp.eq.s32.totalorder %v31, %v47
    %49 = vset.pattern.permute.xlu0 1
    %50 = vperm.xlu0 %49, %v37
    %v51 = vpop.permute.xlu0 %50
    %vm52 = vcmp.eq.s32.totalorder %v51, 1
    %vm53 = vmand %vm48, %vm52
    %v54 = vsel %vm53, 1.0, 0.0
    %v55 = vadd.f32 %v44, %v54
    %56 = vset.pattern.permute.xlu0 2
    %57 = vperm.xlu0 %56, %v29
    %v58 = vpop.permute.xlu0 %57
    %vm59 = vcmp.eq.s32.totalorder %v31, %v58
    %60 = vset.pattern.permute.xlu0 2
    %61 = vperm.xlu0 %60, %v37
    %v62 = vpop.permute.xlu0 %61
    %vm63 = vcmp.eq.s32.totalorder %v62, 1
    %vm64 = vmand %vm59, %vm63
    %v65 = vsel %vm64, 1.0, 0.0
    %v66 = vadd.f32 %v55, %v65
    %v67 = vlaneseq
    %v68 = vshrl.u32 %v67, 7
    %v69 = vsub.s32 0, %v68
    %v70 = vrot.slane %v66, %v69
    %72 = vbcast.lane.b32.xlu0 %v70, 256
    %v73 = vpop.permute.xlu0 %72
    %v74 = vlaneseq
    %v75 = vshrl.u32 %v74, 7
    %v76 = vsub.s32 1, %v75
    %v77 = vrot.slane %v66, %v76
    %79 = vbcast.lane.b32.xlu0 %v77, 256
    %v80 = vpop.permute.xlu0 %79
    %v81 = vlaneseq
    %v82 = vshrl.u32 %v81, 7
    %v83 = vsub.s32 2, %v82
    %v84 = vrot.slane %v66, %v83
    %86 = vbcast.lane.b32.xlu0 %v84, 256
    %v87 = vpop.permute.xlu0 %86
    %v88 = vlaneseq
    %v89 = vshrl.u32 %v88, 7
    %v90 = vsub.s32 3, %v89
    %v91 = vrot.slane %v66, %v90
    %93 = vbcast.lane.b32.xlu0 %v91, 256
    %v94 = vpop.permute.xlu0 %93
    %v95 = vlaneseq
    %v96 = vshrl.u32 %v95, 7
    %v97 = vsub.s32 4, %v96
    %v98 = vrot.slane %v66, %v97
    %100 = vbcast.lane.b32.xlu0 %v98, 256
    %v101 = vpop.permute.xlu0 %100
    %v102 = vlaneseq
    %v103 = vshrl.u32 %v102, 7
    %v104 = vsub.s32 5, %v103
    %v105 = vrot.slane %v66, %v104
    %107 = vbcast.lane.b32.xlu0 %v105, 256
    %v108 = vpop.permute.xlu0 %107
    %v109 = vlaneseq
    %v110 = vshrl.u32 %v109, 7
    %v111 = vsub.s32 6, %v110
    %v112 = vrot.slane %v66, %v111
    %114 = vbcast.lane.b32.xlu0 %v112, 256
    %v115 = vpop.permute.xlu0 %114
    %v116 = vlaneseq
    %v117 = vshrl.u32 %v116, 7
    %v118 = vsub.s32 7, %v117
    %v119 = vrot.slane %v66, %v118
    %121 = vbcast.lane.b32.xlu0 %v119, 256
    %v122 = vpop.permute.xlu0 %121
    %v123 = vld [vmem:[#allocation2] sm:$0xff]
    %v124 = vld [vmem:[#allocation2 + $0x8] sm:$0xff]
    %v125 = vld [vmem:[#allocation2 + $0x10] sm:$0xff]
    %v126 = vld [vmem:[#allocation2 + $0x18] sm:$0xff]
    %v127 = vld [vmem:[#allocation2 + $0x20] sm:$0xff]
    %v128 = vld [vmem:[#allocation2 + $0x28] sm:$0xff]
    %v129 = vld [vmem:[#allocation2 + $0x30] sm:$0xff]
    %v130 = vld [vmem:[#allocation2 + $0x38] sm:$0xff]
    %v131 = vmul.f32 %v73, %v123
    %v132 = vmul.f32 %v80, %v124
    %v133 = vmul.f32 %v87, %v125
    %v134 = vmul.f32 %v94, %v126
    %v135 = vmul.f32 %v101, %v127
    %v136 = vmul.f32 %v108, %v128
    %v137 = vmul.f32 %v115, %v129
    %v138 = vmul.f32 %v122, %v130
    %vm139 = vcmask 261120
    %v140 = vsel %vm139, %v131, 0.0
    %v141 = vrot.slane %v140, 4
    %v142 = vadd.f32 %v140, %v141
    %v143 = vrot.slane %v142, 2
    %v144 = vadd.f32 %v142, %v143
    %v145 = vrot.slane %v144, 1
    %v146 = vadd.f32 %v144, %v145
    %v147 = vsel %vm139, %v132, 0.0
    %v148 = vrot.slane %v147, 4
    %v149 = vadd.f32 %v147, %v148
    %v150 = vrot.slane %v149, 2
    %v151 = vadd.f32 %v149, %v150
    %v152 = vrot.slane %v151, 1
    %v153 = vadd.f32 %v151, %v152
    %v154 = vsel %vm139, %v133, 0.0
    %v155 = vrot.slane %v154, 4
    %v156 = vadd.f32 %v154, %v155
    %v157 = vrot.slane %v156, 2
    %v158 = vadd.f32 %v156, %v157
    %v159 = vrot.slane %v158, 1
    %v160 = vadd.f32 %v158, %v159
    %v161 = vsel %vm139, %v134, 0.0
    %v162 = vrot.slane %v161, 4
    %v163 = vadd.f32 %v161, %v162
    %v164 = vrot.slane %v163, 2
    %v165 = vadd.f32 %v163, %v164
    %v166 = vrot.slane %v165, 1
    %v167 = vadd.f32 %v165, %v166
    %v168 = vsel %vm139, %v135, 0.0
    %v169 = vrot.slane %v168, 4
    %v170 = vadd.f32 %v168, %v169
    %v171 = vrot.slane %v170, 2
    %v172 = vadd.f32 %v170, %v171
    %v173 = vrot.slane %v172, 1
    %v174 = vadd.f32 %v172, %v173
    %v175 = vsel %vm139, %v136, 0.0
    %v176 = vrot.slane %v175, 4
    %v177 = vadd.f32 %v175, %v176
    %v178 = vrot.slane %v177, 2
    %v179 = vadd.f32 %v177, %v178
    %v180 = vrot.slane %v179, 1
    %v181 = vadd.f32 %v179, %v180
    %v182 = vsel %vm139, %v137, 0.0
    %v183 = vrot.slane %v182, 4
    %v184 = vadd.f32 %v182, %v183
    %v185 = vrot.slane %v184, 2
    %v186 = vadd.f32 %v184, %v185
    %v187 = vrot.slane %v186, 1
    %v188 = vadd.f32 %v186, %v187
    %v189 = vsel %vm139, %v138, 0.0
    %v190 = vrot.slane %v189, 4
    %v191 = vadd.f32 %v189, %v190
    %v192 = vrot.slane %v191, 2
    %v193 = vadd.f32 %v191, %v192
    %v194 = vrot.slane %v193, 1
    %v195 = vadd.f32 %v193, %v194
    %v196 = vld [vmem:[%s0] sm:$0xff]
    %vm205 = vcmask 1041409
    %v206 = vsel %vm205, %v153, %v146
    %vm207 = vcmask 1042434
    %v208 = vsel %vm207, %v160, %v206
    %vm209 = vcmask 1043459
    %v210 = vsel %vm209, %v167, %v208
    %vm211 = vcmask 1044484
    %v212 = vsel %vm211, %v174, %v210
    %vm213 = vcmask 1045509
    %v214 = vsel %vm213, %v181, %v212
    %vm215 = vcmask 1046534
    %v216 = vsel %vm215, %v188, %v214
    %vm217 = vcmask 1047559
    %v218 = vsel %vm217, %v195, %v216
    %v220 = vadd.f32 %v196, %v218
    %221 = vst.msk [vmem:[#allocation5] sm:$0xff] %vm139, %v220
    // Predicated region
    $region18: #{tpu_custom_call.1} parent=1 // pred_check
      _
    $region19: #{tpu_custom_call.1} parent=1 // pred_check_branch
      %223 = sbr.rel (0) target = $region21
    $region20: #{tpu_custom_call.1} parent=1 // pred_region
      %s225 = ssub.s32 128, 128
      %226 = vsyncadd [#allocation4], %s225
      %s228 = sshll.u32 [#allocation5], 4
      %s229 = int_to_ptr.vmem [resolvable:$true] %s228
      %231 = dma.vmem_to_hbm [thread:$0]  %s229, 128, %s3, [#allocation4]
    $region21: #{tpu_custom_call.1} parent=1 // pred_fallthru
      _
    // Predicated region
    $region22: #{tpu_custom_call.1} parent=1 // pred_check
      _
    $region23: #{tpu_custom_call.1} parent=1 // pred_check_branch
      %233 = sbr.rel (0) target = $region25
    $region24: #{tpu_custom_call.1} parent=1 // pred_region
      %234 = dma.done [#allocation4], 128
    $region25: #{tpu_custom_call.1} parent=1 // pred_fallthru
      _
    %235 = vsyncpa [#allocation3], 1
    %236 = vsyncpa [#allocation4], 1

</llo_original>
